<compile_context>
chip_gen: v6e
topology: v6e:2x2x1
jax: 0.10.0
libtpu: 0.0.40
codegen_flags: <defaults>
</compile_context>

<pallas_src>
import math
import functools

import jax
import jax.numpy as jnp
from jax.experimental import pallas as pl
from jax.experimental.pallas import tpu as pltpu


def _round_up(x, m):
    return ((x + m - 1) // m) * m


def _mlp_kernel(x_ref, g_ref, beta_ref, w1_ref, b1_ref, w2_ref, b2_ref,
                o_ref, xn_ref, acc_ref):
    k = pl.program_id(1)

    # ---- k == 0: LayerNorm this row tile once, zero the fc2 accumulator ----
    @pl.when(k == 0)
    def _():
        x = x_ref[...].astype(jnp.float32)                       # (tm, C)
        mean = jnp.mean(x, axis=-1, keepdims=True)
        var = jnp.mean(jnp.square(x - mean), axis=-1, keepdims=True)
        xn = (x - mean) * jax.lax.rsqrt(var + 1e-5)               # eps matches nn.LayerNorm
        xn = xn * g_ref[...].astype(jnp.float32) + beta_ref[...].astype(jnp.float32)
        xn_ref[...] = xn.astype(xn_ref.dtype)                     # bf16 for the MXU
        acc_ref[...] = jnp.zeros_like(acc_ref)

    # ---- fc1 slice (C x th) + exact erf-GELU (matches nn.GELU default) -----
    h = jnp.dot(xn_ref[...], w1_ref[...],
                preferred_element_type=jnp.float32) + b1_ref[...].astype(jnp.float32)
    h = 0.5 * h * (1.0 + jax.lax.erf(h * (1.0 / math.sqrt(2.0))))

    # dropout(p=0.0) is identity -> nothing to do.
    # TODO(synk): non-zero dropout would need pltpu.prng_seed / prng_random_bits.

    # ---- fc2 partial product, accumulated over the H axis ------------------
    acc_ref[...] += jnp.dot(h.astype(w2_ref.dtype), w2_ref[...],
                            preferred_element_type=jnp.float32)

    # ---- last H step: add bias, store the (lane-dense) output tile ---------
    @pl.when(k == pl.num_programs(1) - 1)
    def _():
        o_ref[...] = (acc_ref[...] + b2_ref[...].astype(jnp.float32)).astype(o_ref.dtype)


@functools.partial(jax.jit, static_argnames=("tm", "th"))
def mlp_pallas(x, gamma, beta, w1, b1, w2, b2, tm=256, th=512):
    """x: (B, N, C).  Weights stored as (in, out) so the kernel does x @ W."""
    B, N, C = x.shape
    H = w1.shape[1]
    C_out = w2.shape[1]
    M = B * N

    # MXU/lane-friendly tile sizes; shrink for tiny problems, pad otherwise.
    tm = min(tm, _round_up(M, 128))
    th = min(th, _round_up(H, 128))
    M_pad = _round_up(M, tm)
    H_pad = _round_up(H, th)
    C_out_pad = _round_up(C_out, 128)

    # Zero padding is numerically inert: padded rows are discarded; padded
    # hidden units have zero W2 rows; padded output columns are sliced off.
    x2 = jnp.pad(x.reshape(M, C), ((0, M_pad - M), (0, 0)))
    gamma2 = gamma.reshape(1, C).astype(jnp.float32)
    beta2 = beta.reshape(1, C).astype(jnp.float32)
    w1p = jnp.pad(w1, ((0, 0), (0, H_pad - H))).astype(jnp.bfloat16)
    b1p = jnp.pad(b1.reshape(1, H), ((0, 0), (0, H_pad - H))).astype(jnp.float32)
    w2p = jnp.pad(w2, ((0, H_pad - H), (0, C_out_pad - C_out))).astype(jnp.bfloat16)
    b2p = jnp.pad(b2.reshape(1, C_out),
                  ((0, 0), (0, C_out_pad - C_out))).astype(jnp.float32)

    grid = (M_pad // tm, H_pad // th)

    flops = 2 * M_pad * (C * H_pad + H_pad * C_out_pad)
    bytes_accessed = (x2.size * 4 + w1p.size * 2 + w2p.size * 2
                      + b1p.size * 4 + b2p.size * 4 + 2 * C * 4
                      + M_pad * C_out_pad * 4)

    out = pl.pallas_call(
        _mlp_kernel,
        out_shape=jax.ShapeDtypeStruct((M_pad, C_out_pad), x.dtype),
        grid_spec=pltpu.PrefetchScalarGridSpec(
            num_scalar_prefetch=0,
            grid=grid,
            in_specs=[
                pl.BlockSpec((tm, C), lambda i, k: (i, 0)),          # x tile
                pl.BlockSpec((1, C), lambda i, k: (0, 0)),           # gamma
                pl.BlockSpec((1, C), lambda i, k: (0, 0)),           # beta
                pl.BlockSpec((C, th), lambda i, k: (0, k)),          # W1 slice
                pl.BlockSpec((1, th), lambda i, k: (0, k)),          # b1 slice
                pl.BlockSpec((th, C_out_pad), lambda i, k: (k, 0)),  # W2 slice
                pl.BlockSpec((1, C_out_pad), lambda i, k: (0, 0)),   # b2
            ],
            out_specs=pl.BlockSpec((tm, C_out_pad), lambda i, k: (i, 0)),
            scratch_shapes=[
                pltpu.VMEM((tm, C), jnp.bfloat16),          # LayerNorm'd rows
                pltpu.VMEM((tm, C_out_pad), jnp.float32),   # fc2 accumulator
            ],
        ),
        compiler_params=pltpu.CompilerParams(
            dimension_semantics=("parallel", "arbitrary")),
        cost_estimate=pl.CostEstimate(
            flops=flops,
            transcendentals=M_pad * H_pad,
            bytes_accessed=bytes_accessed),
    )(x2, gamma2, beta2, w1p, b1p, w2p, b2p)

    return out[:M, :C_out].reshape(B, N, C_out)


def _reference(x, gamma, beta, w1, b1, w2, b2):
    mean = jnp.mean(x, axis=-1, keepdims=True)
    var = jnp.mean((x - mean) ** 2, axis=-1, keepdims=True)
    xn = (x - mean) / jnp.sqrt(var + 1e-5) * gamma + beta
    h = xn @ w1 + b1
    h = 0.5 * h * (1.0 + jax.lax.erf(h / math.sqrt(2.0)))
    return h @ w2 + b2


if __name__ == "__main__":
    B, N, C, H = 2, 8, 32, 64  # batch, tokens, in_features, hidden_features
    key = jax.random.PRNGKey(0)
    kx, k1, k2, kb1, kb2 = jax.random.split(key, 5)

    x = jax.random.normal(kx, (B, N, C), dtype=jnp.float32)

    # Deterministic parameter init (shapes from Mlp.__init__):
    gamma = jnp.ones((C,), jnp.float32)          # LayerNorm weight
    beta = jnp.zeros((C,), jnp.float32)          # LayerNorm bias
    w1 = jax.random.normal(k1, (C, H), jnp.float32) * (1.0 / math.sqrt(C))
    b1 = jax.random.normal(kb1, (H,), jnp.float32) * 0.02
    w2 = jax.random.normal(k2, (H, C), jnp.float32) * (1.0 / math.sqrt(H))
    b2 = jax.random.normal(kb2, (C,), jnp.float32) * 0.02

    y = mlp_pallas(x, gamma, beta, w1, b1, w2, b2)
    jax.block_until_ready(y)

    y_ref = _reference(x, gamma, beta, w1, b1, w2, b2)
    assert y.shape == (B, N, C)
    # bf16 MXU operands (f32 accumulation) -> relaxed tolerance vs f32 reference.
    assert jnp.allclose(y, y_ref, atol=5e-2, rtol=5e-2), (
        float(jnp.max(jnp.abs(y - y_ref))))

    print("KERNEL_OK")
</pallas_src>

<mosaic_0001>
module attributes {stable_mosaic.version = 11 : i64} {
  func.func @_mlp_kernel(%arg0: i32, %arg1: i32, %arg2: memref<128x32xf32, #tpu.memory_space<vmem>>, %arg3: memref<1x32xf32, #tpu.memory_space<vmem>>, %arg4: memref<1x32xf32, #tpu.memory_space<vmem>>, %arg5: memref<32x128xbf16, #tpu.memory_space<vmem>>, %arg6: memref<1x128xf32, #tpu.memory_space<vmem>>, %arg7: memref<128x128xbf16, #tpu.memory_space<vmem>>, %arg8: memref<1x128xf32, #tpu.memory_space<vmem>>, %arg9: memref<128x128xf32, #tpu.memory_space<vmem>>, %arg10: memref<128x32xbf16, #tpu.memory_space<vmem>>, %arg11: memref<128x128xf32, #tpu.memory_space<vmem>>) attributes {dimension_semantics = [#tpu.dimension_semantics<parallel>, #tpu.dimension_semantics<arbitrary>], iteration_bounds = array<i64: 1, 1>, scalar_prefetch = 0 : i64, scratch_operands = 2 : i64, tpu.core_type = #tpu.core_type<tc>, window_params = [{transform_indices = @transform_0, window_bounds = array<i64: 128, 32>}, {pipeline_mode = #tpu.pipeline_mode<synchronous>, transform_indices = @transform_1, window_bounds = array<i64: 1, 32>}, {pipeline_mode = #tpu.pipeline_mode<synchronous>, transform_indices = @transform_2, window_bounds = array<i64: 1, 32>}, {transform_indices = @transform_3, window_bounds = array<i64: 32, 128>}, {transform_indices = @transform_4, window_bounds = array<i64: 1, 128>}, {transform_indices = @transform_5, window_bounds = array<i64: 128, 128>}, {pipeline_mode = #tpu.pipeline_mode<synchronous>, transform_indices = @transform_6, window_bounds = array<i64: 1, 128>}, {transform_indices = @transform_7, window_bounds = array<i64: 128, 128>}]} {
    %c0_i32 = arith.constant 0 : i32
    %0 = arith.cmpi eq, %arg1, %c0_i32 : i32
    %1 = arith.extui %0 : i1 to i32
    %c0_i32_0 = arith.constant 0 : i32
    %2 = arith.cmpi ne, %1, %c0_i32_0 : i32
    scf.if %2 {
      %c0_18 = arith.constant 0 : index
      %c0_19 = arith.constant 0 : index
      %26 = vector.load %arg2[%c0_18, %c0_19] : memref<128x32xf32, #tpu.memory_space<vmem>>, vector<128x32xf32>
      %cst_20 = arith.constant dense<0.000000e+00> : vector<128xf32>
      %27 = vector.multi_reduction <add>, %26, %cst_20 [1] : vector<128x32xf32> to vector<128xf32>
      %28 = vector.shape_cast %27 : vector<128xf32> to vector<128x1xf32>
      %cst_21 = arith.constant 3.200000e+01 : f32
      %29 = vector.broadcast %cst_21 : f32 to vector<128x1xf32>
      %30 = arith.divf %28, %29 : vector<128x1xf32>
      %31 = vector.broadcast %30 : vector<128x1xf32> to vector<128x32xf32>
      %32 = arith.subf %26, %31 : vector<128x32xf32>
      %33 = arith.mulf %32, %32 : vector<128x32xf32>
      %cst_22 = arith.constant dense<0.000000e+00> : vector<128xf32>
      %34 = vector.multi_reduction <add>, %33, %cst_22 [1] : vector<128x32xf32> to vector<128xf32>
      %35 = vector.shape_cast %34 : vector<128xf32> to vector<128x1xf32>
      %cst_23 = arith.constant 3.200000e+01 : f32
      %36 = vector.broadcast %cst_23 : f32 to vector<128x1xf32>
      %37 = arith.divf %35, %36 : vector<128x1xf32>
      %38 = vector.broadcast %30 : vector<128x1xf32> to vector<128x32xf32>
      %39 = arith.subf %26, %38 : vector<128x32xf32>
      %cst_24 = arith.constant 9.99999974E-6 : f32
      %40 = vector.broadcast %cst_24 : f32 to vector<128x1xf32>
      %41 = arith.addf %37, %40 : vector<128x1xf32>
      %42 = math.rsqrt %41 : vector<128x1xf32>
      %43 = vector.broadcast %42 : vector<128x1xf32> to vector<128x32xf32>
      %44 = arith.mulf %39, %43 : vector<128x32xf32>
      %c0_25 = arith.constant 0 : index
      %c0_26 = arith.constant 0 : index
      %45 = vector.load %arg3[%c0_25, %c0_26] : memref<1x32xf32, #tpu.memory_space<vmem>>, vector<1x32xf32>
      %46 = vector.broadcast %45 : vector<1x32xf32> to vector<128x32xf32>
      %47 = arith.mulf %44, %46 : vector<128x32xf32>
      %c0_27 = arith.constant 0 : index
      %c0_28 = arith.constant 0 : index
      %48 = vector.load %arg4[%c0_27, %c0_28] : memref<1x32xf32, #tpu.memory_space<vmem>>, vector<1x32xf32>
      %49 = vector.broadcast %48 : vector<1x32xf32> to vector<128x32xf32>
      %50 = arith.addf %47, %49 : vector<128x32xf32>
      %51 = arith.truncf %50 : vector<128x32xf32> to vector<128x32xbf16>
      %c0_29 = arith.constant 0 : index
      %c0_30 = arith.constant 0 : index
      %52 = vector.load %arg10[%c0_29, %c0_30] : memref<128x32xbf16, #tpu.memory_space<vmem>>, vector<128x32xbf16>
      tpu.vector_store %arg10[%c0_29, %c0_30], %51 {strides = array<i32>} : memref<128x32xbf16, #tpu.memory_space<vmem>>, vector<128x32xbf16>,
      %cst_31 = arith.constant 0.000000e+00 : f32
      %53 = vector.broadcast %cst_31 : f32 to vector<128x128xf32>
      %c0_32 = arith.constant 0 : index
      %c0_33 = arith.constant 0 : index
      %54 = vector.load %arg11[%c0_32, %c0_33] : memref<128x128xf32, #tpu.memory_space<vmem>>, vector<128x128xf32>
      tpu.vector_store %arg11[%c0_32, %c0_33], %53 {strides = array<i32>} : memref<128x128xf32, #tpu.memory_space<vmem>>, vector<128x128xf32>,
    } else {
    }
    %c0 = arith.constant 0 : index
    %c0_1 = arith.constant 0 : index
    %3 = vector.load %arg10[%c0, %c0_1] : memref<128x32xbf16, #tpu.memory_space<vmem>>, vector<128x32xbf16>
    %c0_2 = arith.constant 0 : index
    %c0_3 = arith.constant 0 : index
    %4 = vector.load %arg5[%c0_2, %c0_3] : memref<32x128xbf16, #tpu.memory_space<vmem>>, vector<32x128xbf16>
    %cst = arith.constant dense<0.000000e+00> : vector<128x128xf32>
    %5 = tpu.matmul %3, %4, %cst {dimension_numbers = #tpu.dot_dimension_numbers<[1], [0], [0], [1], [0, 0, 1, 1], [], []>} : vector<128x32xbf16>, vector<32x128xbf16>, vector<128x128xf32> -> vector<128x128xf32>
    %c0_4 = arith.constant 0 : index
    %c0_5 = arith.constant 0 : index
    %6 = vector.load %arg6[%c0_4, %c0_5] : memref<1x128xf32, #tpu.memory_space<vmem>>, vector<1x128xf32>
    %7 = vector.broadcast %6 : vector<1x128xf32> to vector<128x128xf32>
    %8 = arith.addf %5, %7 : vector<128x128xf32>
    %cst_6 = arith.constant 5.000000e-01 : f32
    %9 = vector.broadcast %cst_6 : f32 to vector<128x128xf32>
    %10 = arith.mulf %9, %8 : vector<128x128xf32>
    %cst_7 = arith.constant 0.707106769 : f32
    %11 = vector.broadcast %cst_7 : f32 to vector<128x128xf32>
    %12 = arith.mulf %8, %11 : vector<128x128xf32>
    %13 = math.erf %12 : vector<128x128xf32>
    %cst_8 = arith.constant 1.000000e+00 : f32
    %14 = vector.broadcast %cst_8 : f32 to vector<128x128xf32>
    %15 = arith.addf %14, %13 : vector<128x128xf32>
    %16 = arith.mulf %10, %15 : vector<128x128xf32>
    %c0_9 = arith.constant 0 : index
    %c0_10 = arith.constant 0 : index
    %17 = vector.load %arg11[%c0_9, %c0_10] : memref<128x128xf32, #tpu.memory_space<vmem>>, vector<128x128xf32>
    %18 = arith.truncf %16 : vector<128x128xf32> to vector<128x128xbf16>
    %c0_11 = arith.constant 0 : index
    %c0_12 = arith.constant 0 : index
    %19 = vector.load %arg7[%c0_11, %c0_12] : memref<128x128xbf16, #tpu.memory_space<vmem>>, vector<128x128xbf16>
    %cst_13 = arith.constant dense<0.000000e+00> : vector<128x128xf32>
    %20 = tpu.matmul %18, %19, %cst_13 {dimension_numbers = #tpu.dot_dimension_numbers<[1], [0], [0], [1], [0, 0, 1, 1], [], []>} : vector<128x128xbf16>, vector<128x128xbf16>, vector<128x128xf32> -> vector<128x128xf32>
    %21 = arith.addf %17, %20 : vector<128x128xf32>
    %c0_14 = arith.constant 0 : index
    %c0_15 = arith.constant 0 : index
    %22 = vector.load %arg11[%c0_14, %c0_15] : memref<128x128xf32, #tpu.memory_space<vmem>>, vector<128x128xf32>
    tpu.vector_store %arg11[%c0_14, %c0_15], %21 {strides = array<i32>} : memref<128x128xf32, #tpu.memory_space<vmem>>, vector<128x128xf32>,
    %c0_i32_16 = arith.constant 0 : i32
    %23 = arith.cmpi eq, %arg1, %c0_i32_16 : i32
    %24 = arith.extui %23 : i1 to i32
    %c0_i32_17 = arith.constant 0 : i32
    %25 = arith.cmpi ne, %24, %c0_i32_17 : i32
    scf.if %25 {
      %c0_18 = arith.constant 0 : index
      %c0_19 = arith.constant 0 : index
      %26 = vector.load %arg11[%c0_18, %c0_19] : memref<128x128xf32, #tpu.memory_space<vmem>>, vector<128x128xf32>
      %c0_20 = arith.constant 0 : index
      %c0_21 = arith.constant 0 : index
      %27 = vector.load %arg8[%c0_20, %c0_21] : memref<1x128xf32, #tpu.memory_space<vmem>>, vector<1x128xf32>
      %28 = vector.broadcast %27 : vector<1x128xf32> to vector<128x128xf32>
      %29 = arith.addf %26, %28 : vector<128x128xf32>
      %c0_22 = arith.constant 0 : index
      %c0_23 = arith.constant 0 : index
      %30 = vector.load %arg9[%c0_22, %c0_23] : memref<128x128xf32, #tpu.memory_space<vmem>>, vector<128x128xf32>
      tpu.vector_store %arg9[%c0_22, %c0_23], %29 {strides = array<i32>} : memref<128x128xf32, #tpu.memory_space<vmem>>, vector<128x128xf32>,
    } else {
    }
    return
  }
  func.func @transform_0(%arg0: i32, %arg1: i32) -> (i32, i32) {
    %c0_i32 = arith.constant 0 : i32
    %c0_i32_0 = arith.constant 0 : i32
    return %arg0, %c0_i32 : i32, i32
  }
  func.func @transform_1(%arg0: i32, %arg1: i32) -> (i32, i32) {
    %c0_i32 = arith.constant 0 : i32
    %c0_i32_0 = arith.constant 0 : i32
    %c0_i32_1 = arith.constant 0 : i32
    return %c0_i32, %c0_i32_0 : i32, i32
  }
  func.func @transform_2(%arg0: i32, %arg1: i32) -> (i32, i32) {
    %c0_i32 = arith.constant 0 : i32
    %c0_i32_0 = arith.constant 0 : i32
    %c0_i32_1 = arith.constant 0 : i32
    return %c0_i32, %c0_i32_0 : i32, i32
  }
  func.func @transform_3(%arg0: i32, %arg1: i32) -> (i32, i32) {
    %c0_i32 = arith.constant 0 : i32
    %c0_i32_0 = arith.constant 0 : i32
    return %c0_i32, %arg1 : i32, i32
  }
  func.func @transform_4(%arg0: i32, %arg1: i32) -> (i32, i32) {
    %c0_i32 = arith.constant 0 : i32
    %c0_i32_0 = arith.constant 0 : i32
    return %c0_i32, %arg1 : i32, i32
  }
  func.func @transform_5(%arg0: i32, %arg1: i32) -> (i32, i32) {
    %c0_i32 = arith.constant 0 : i32
    %c0_i32_0 = arith.constant 0 : i32
    return %arg1, %c0_i32 : i32, i32
  }
  func.func @transform_6(%arg0: i32, %arg1: i32) -> (i32, i32) {
    %c0_i32 = arith.constant 0 : i32
    %c0_i32_0 = arith.constant 0 : i32
    %c0_i32_1 = arith.constant 0 : i32
    return %c0_i32, %c0_i32_0 : i32, i32
  }
  func.func @transform_7(%arg0: i32, %arg1: i32) -> (i32, i32) {
    %c0_i32 = arith.constant 0 : i32
    %c0_i32_0 = arith.constant 0 : i32
    return %arg0, %c0_i32 : i32, i32
  }
}

</mosaic_0001>

<llo_original>
// kernel: mlp_pallas.1
$region0: #{mlp_pallas.1}
  #allocation0 [shape = 'u32[]', space=smem, size = 0x4, offset = 0x4, fixed_abs, tag = 'smem constant byte address 0x4 - core index']
  #allocation1 [shape = 'u32[144,128]{1,0:T(1,128)}', space=vmem, size = 0x12000, scoped, tag = 'internal scratch']
  #allocation2 [shape = 'bf16[128,32]{1,0:T(8,128)(2,1)}', space=vmem, size = 0x8000, scoped, tag = 'scratch operand']
  #allocation3 [shape = 'f32[128,128]{1,0:T(8,128)}', space=vmem, size = 0x10000, scoped, tag = 'scratch operand']
  %s0 = inlined_call_operand.vmem [shape: f32[128,32], index: 0, kind: input, shape index: {}]
  %s1 = inlined_call_operand.vmem [shape: f32[1,32], index: 1, kind: input, shape index: {}]
  %s2 = inlined_call_operand.vmem [shape: f32[1,32], index: 2, kind: input, shape index: {}]
  %s3 = inlined_call_operand.vmem [shape: bf16[32,128], index: 3, kind: input, shape index: {}]
  %s4 = inlined_call_operand.vmem [shape: f32[1,128], index: 4, kind: input, shape index: {}]
  %s5 = inlined_call_operand.vmem [shape: bf16[128,128], index: 5, kind: input, shape index: {}]
  %s6 = inlined_call_operand.vmem [shape: f32[1,128], index: 6, kind: input, shape index: {}]
  %s7 = inlined_call_operand.vmem [shape: f32[128,128], index: 7, kind: output, shape index: {}]
  %s8 = sld [smem:[#allocation0]]
  $region46: #{mlp_pallas.1} parent=0
    _
  %s10 = ssub.s32 1, %s8
  %s11 = scalar_select 0, %s10, %s8
  // Predicated region
  $region2: #{mlp_pallas.1} parent=0 // pred_check
    _
  $region3: #{mlp_pallas.1} parent=0 // pred_check_branch
    %13 = sbr.rel (0) target = $region5
  $region4: #{mlp_pallas.1} parent=0 // pred_region
    _
  $region5: #{mlp_pallas.1} parent=0 // pred_fallthru
    _
  // Predicated region
  $region6: #{mlp_pallas.1} parent=0 // pred_check
    _
  $region7: #{mlp_pallas.1} parent=0 // pred_check_branch
    %15 = sbr.rel (0) target = $region9
  $region8: #{mlp_pallas.1} parent=0 // pred_region
    _
  $region9: #{mlp_pallas.1} parent=0 // pred_fallthru
    _
  // Predicated region
  $region10: #{mlp_pallas.1} parent=0 // pred_check
    _
  $region11: #{mlp_pallas.1} parent=0 // pred_check_branch
    %17 = sbr.rel (0) target = $region13
  $region12: #{mlp_pallas.1} parent=0 // pred_region
    _
  $region13: #{mlp_pallas.1} parent=0 // pred_fallthru
    _
  // Predicated region
  $region14: #{mlp_pallas.1} parent=0 // pred_check
    _
  $region15: #{mlp_pallas.1} parent=0 // pred_check_branch
    %19 = sbr.rel (0) target = $region17
  $region16: #{mlp_pallas.1} parent=0 // pred_region
    _
  $region17: #{mlp_pallas.1} parent=0 // pred_fallthru
    _
  // Predicated region
  $region18: #{mlp_pallas.1} parent=0 // pred_check
    _
  $region19: #{mlp_pallas.1} parent=0 // pred_check_branch
    %21 = sbr.rel (0) target = $region21
  $region20: #{mlp_pallas.1} parent=0 // pred_region
    _
  $region21: #{mlp_pallas.1} parent=0 // pred_fallthru
    _
  // Predicated region
  $region22: #{mlp_pallas.1} parent=0 // pred_check
    _
  $region23: #{mlp_pallas.1} parent=0 // pred_check_branch
    %23 = sbr.rel (0) target = $region25
  $region24: #{mlp_pallas.1} parent=0 // pred_region
    _
  $region25: #{mlp_pallas.1} parent=0 // pred_fallthru
    _
  // Predicated region
  $region26: #{mlp_pallas.1} parent=0 // pred_check
    _
  $region27: #{mlp_pallas.1} parent=0 // pred_check_branch
    %25 = sbr.rel (0) target = $region29
  $region28: #{mlp_pallas.1} parent=0 // pred_region
    _
  $region29: #{mlp_pallas.1} parent=0 // pred_fallthru
    _
  %p27 = scmp.eq.s32.totalorder 0, 0
  // Predicated region
  $region30: #{mlp_pallas.1} parent=0 // pred_check
    %p28 = pneg %p27
  $region31: #{mlp_pallas.1} parent=0 // pred_check_branch
    %30 = sbr.rel (%p28) target = $region33
  $region32: #{mlp_pallas.1} parent=0 // pred_region
    %v31 = vld [vmem:[%s0] sm:$0xff]
    %v32 = vld [vmem:[%s0 + $0x8] sm:$0xff]
    %v33 = vld [vmem:[%s0 + $0x10] sm:$0xff]
    %v34 = vld [vmem:[%s0 + $0x18] sm:$0xff]
    %v35 = vld [vmem:[%s0 + $0x20] sm:$0xff]
    %v36 = vld [vmem:[%s0 + $0x28] sm:$0xff]
    %v37 = vld [vmem:[%s0 + $0x30] sm:$0xff]
    %v38 = vld [vmem:[%s0 + $0x38] sm:$0xff]
    %v39 = vld [vmem:[%s0 + $0x40] sm:$0xff]
    %v40 = vld [vmem:[%s0 + $0x48] sm:$0xff]
    %v41 = vld [vmem:[%s0 + $0x50] sm:$0xff]
    %v42 = vld [vmem:[%s0 + $0x58] sm:$0xff]
    %v43 = vld [vmem:[%s0 + $0x60] sm:$0xff]
    %v44 = vld [vmem:[%s0 + $0x68] sm:$0xff]
    %v45 = vld [vmem:[%s0 + $0x70] sm:$0xff]
    %v46 = vld [vmem:[%s0 + $0x78] sm:$0xff]
    %vm47 = vcmask 261120
    %v48 = vsel %vm47, %v31, 0.0
    %49 = vadd.xlane.f32.xlu0 %v48
    %v50 = vpop.xlane.xlu0 %49
    %v51 = vsel %vm47, %v32, 0.0
    %52 = vadd.xlane.f32.xlu0 %v51
    %v53 = vpop.xlane.xlu0 %52
    %v54 = vsel %vm47, %v33, 0.0
    %55 = vadd.xlane.f32.xlu0 %v54
    %v56 = vpop.xlane.xlu0 %55
    %v57 = vsel %vm47, %v34, 0.0
    %58 = vadd.xlane.f32.xlu0 %v57
    %v59 = vpop.xlane.xlu0 %58
    %v60 = vsel %vm47, %v35, 0.0
    %61 = vadd.xlane.f32.xlu0 %v60
    %v62 = vpop.xlane.xlu0 %61
    %v63 = vsel %vm47, %v36, 0.0
    %64 = vadd.xlane.f32.xlu0 %v63
    %v65 = vpop.xlane.xlu0 %64
    %v66 = vsel %vm47, %v37, 0.0
    %67 = vadd.xlane.f32.xlu0 %v66
    %v68 = vpop.xlane.xlu0 %67
    %v69 = vsel %vm47, %v38, 0.0
    %70 = vadd.xlane.f32.xlu0 %v69
    %v71 = vpop.xlane.xlu0 %70
    %v72 = vsel %vm47, %v39, 0.0
    %73 = vadd.xlane.f32.xlu0 %v72
    %v74 = vpop.xlane.xlu0 %73
    %v75 = vsel %vm47, %v40, 0.0
    %76 = vadd.xlane.f32.xlu0 %v75
    %v77 = vpop.xlane.xlu0 %76
    %v78 = vsel %vm47, %v41, 0.0
    %79 = vadd.xlane.f32.xlu0 %v78
    %v80 = vpop.xlane.xlu0 %79
    %v81 = vsel %vm47, %v42, 0.0
    %82 = vadd.xlane.f32.xlu0 %v81
    %v83 = vpop.xlane.xlu0 %82
    %v84 = vsel %vm47, %v43, 0.0
    %85 = vadd.xlane.f32.xlu0 %v84
    %v86 = vpop.xlane.xlu0 %85
    %v87 = vsel %vm47, %v44, 0.0
    %88 = vadd.xlane.f32.xlu0 %v87
    %v89 = vpop.xlane.xlu0 %88
    %v90 = vsel %vm47, %v45, 0.0
    %91 = vadd.xlane.f32.xlu0 %v90
    %v92 = vpop.xlane.xlu0 %91
    %v93 = vsel %vm47, %v46, 0.0
    %94 = vadd.xlane.f32.xlu0 %v93
    %v95 = vpop.xlane.xlu0 %94
    %v96 = vrcp.pop 32.0
    %v97 = vmul.f32 %v50, %v96
    %v98 = vmul.f32 %v53, %v96
    %v99 = vmul.f32 %v56, %v96
    %v100 = vmul.f32 %v59, %v96
    %v101 = vmul.f32 %v62, %v96
    %v102 = vmul.f32 %v65, %v96
    %v103 = vmul.f32 %v68, %v96
    %v104 = vmul.f32 %v71, %v96
    %v105 = vmul.f32 %v74, %v96
    %v106 = vmul.f32 %v77, %v96
    %v107 = vmul.f32 %v80, %v96
    %v108 = vmul.f32 %v83, %v96
    %v109 = vmul.f32 %v86, %v96
    %v110 = vmul.f32 %v89, %v96
    %v111 = vmul.f32 %v92, %v96
    %v112 = vmul.f32 %v95, %v96
    %v113 = vsub.f32 %v31, %v97
    %v114 = vsub.f32 %v32, %v98
    %v115 = vsub.f32 %v33, %v99
    %v116 = vsub.f32 %v34, %v100
    %v117 = vsub.f32 %v35, %v101
    %v118 = vsub.f32 %v36, %v102
    %v119 = vsub.f32 %v37, %v103
    %v120 = vsub.f32 %v38, %v104
    %v121 = vsub.f32 %v39, %v105
    %v122 = vsub.f32 %v40, %v106
    %v123 = vsub.f32 %v41, %v107
    %v124 = vsub.f32 %v42, %v108
    %v125 = vsub.f32 %v43, %v109
    %v126 = vsub.f32 %v44, %v110
    %v127 = vsub.f32 %v45, %v111
    %v128 = vsub.f32 %v46, %v112
    %v129 = vmul.f32 %v113, %v113
    %v130 = vmul.f32 %v114, %v114
    %v131 = vmul.f32 %v115, %v115
    %v132 = vmul.f32 %v116, %v116
    %v133 = vmul.f32 %v117, %v117
    %v134 = vmul.f32 %v118, %v118
    %v135 = vmul.f32 %v119, %v119
    %v136 = vmul.f32 %v120, %v120
    %v137 = vmul.f32 %v121, %v121
    %v138 = vmul.f32 %v122, %v122
    %v139 = vmul.f32 %v123, %v123
    %v140 = vmul.f32 %v124, %v124
    %v141 = vmul.f32 %v125, %v125
    %v142 = vmul.f32 %v126, %v126
    %v143 = vmul.f32 %v127, %v127
    %v144 = vmul.f32 %v128, %v128
    %v145 = vsel %vm47, %v129, 0.0
    %146 = vadd.xlane.f32.xlu0 %v145
    %v147 = vpop.xlane.xlu0 %146
    %v148 = vsel %vm47, %v130, 0.0
    %149 = vadd.xlane.f32.xlu0 %v148
    %v150 = vpop.xlane.xlu0 %149
    %v151 = vsel %vm47, %v131, 0.0
    %152 = vadd.xlane.f32.xlu0 %v151
    %v153 = vpop.xlane.xlu0 %152
    %v154 = vsel %vm47, %v132, 0.0
    %155 = vadd.xlane.f32.xlu0 %v154
    %v156 = vpop.xlane.xlu0 %155
    %v157 = vsel %vm47, %v133, 0.0
    %158 = vadd.xlane.f32.xlu0 %v157
    %v159 = vpop.xlane.xlu0 %158
    %v160 = vsel %vm47, %v134, 0.0
    %161 = vadd.xlane.f32.xlu0 %v160
    %v162 = vpop.xlane.xlu0 %161
    %v163 = vsel %vm47, %v135, 0.0
    %164 = vadd.xlane.f32.xlu0 %v163
    %v165 = vpop.xlane.xlu0 %164
    %v166 = vsel %vm47, %v136, 0.0
    %167 = vadd.xlane.f32.xlu0 %v166
    %v168 = vpop.xlane.xlu0 %167
    %v169 = vsel %vm47, %v137, 0.0
    %170 = vadd.xlane.f32.xlu0 %v169
    %v171 = vpop.xlane.xlu0 %170
    %v172 = vsel %vm47, %v138, 0.0
    %173 = vadd.xlane.f32.xlu0 %v172
    %v174 = vpop.xlane.xlu0 %173
    %v175 = vsel %vm47, %v139, 0.0
    %176 = vadd.xlane.f32.xlu0 %v175
    %v177 = vpop.xlane.xlu0 %176
    %v178 = vsel %vm47, %v140, 0.0
    %179 = vadd.xlane.f32.xlu0 %v178
    %v180 = vpop.xlane.xlu0 %179
    %v181 = vsel %vm47, %v141, 0.0
    %182 = vadd.xlane.f32.xlu0 %v181
    %v183 = vpop.xlane.xlu0 %182
    %v184 = vsel %vm47, %v142, 0.0
    %185 = vadd.xlane.f32.xlu0 %v184
    %v186 = vpop.xlane.xlu0 %185
    %v187 = vsel %vm47, %v143, 0.0
    %188 = vadd.xlane.f32.xlu0 %v187
    %v189 = vpop.xlane.xlu0 %188
    %v190 = vsel %vm47, %v144, 0.0
    %191 = vadd.xlane.f32.xlu0 %v190
    %v192 = vpop.xlane.xlu0 %191
    %v193 = vmul.f32 %v147, %v96
    %v194 = vmul.f32 %v150, %v96
    %v195 = vmul.f32 %v153, %v96
    %v196 = vmul.f32 %v156, %v96
    %v197 = vmul.f32 %v159, %v96
    %v198 = vmul.f32 %v162, %v96
    %v199 = vmul.f32 %v165, %v96
    %v200 = vmul.f32 %v168, %v96
    %v201 = vmul.f32 %v171, %v96
    %v202 = vmul.f32 %v174, %v96
    %v203 = vmul.f32 %v177, %v96
    %v204 = vmul.f32 %v180, %v96
    %v205 = vmul.f32 %v183, %v96
    %v206 = vmul.f32 %v186, %v96
    %v207 = vmul.f32 %v189, %v96
    %v208 = vmul.f32 %v192, %v96
    %v209 = vadd.f32 %v193, 1e-05
    %v210 = vadd.f32 %v194, 1e-05
    %v211 = vadd.f32 %v195, 1e-05
    %v212 = vadd.f32 %v196, 1e-05
    %v213 = vadd.f32 %v197, 1e-05
    %v214 = vadd.f32 %v198, 1e-05
    %v215 = vadd.f32 %v199, 1e-05
    %v216 = vadd.f32 %v200, 1e-05
    %v217 = vadd.f32 %v201, 1e-05
    %v218 = vadd.f32 %v202, 1e-05
    %v219 = vadd.f32 %v203, 1e-05
    %v220 = vadd.f32 %v204, 1e-05
    %v221 = vadd.f32 %v205, 1e-05
    %v222 = vadd.f32 %v206, 1e-05
    %v223 = vadd.f32 %v207, 1e-05
    %v224 = vadd.f32 %v208, 1e-05
    %v225 = vrsqrt.pop %v209
    %v226 = vrsqrt.pop %v210
    %v227 = vrsqrt.pop %v211
    %v228 = vrsqrt.pop %v212
    %v229 = vrsqrt.pop %v213
    %v230 = vrsqrt.pop %v214
    %v231 = vrsqrt.pop %v215
    %v232 = vrsqrt.pop %v216
    %v233 = vrsqrt.pop %v217
    %v234 = vrsqrt.pop %v218
    %v235 = vrsqrt.pop %v219
    %v236 = vrsqrt.pop %v220
    %v237 = vrsqrt.pop %v221
    %v238 = vrsqrt.pop %v222
    %v239 = vrsqrt.pop %v223
    %v240 = vrsqrt.pop %v224
    %v241 = vmul.f32 %v113, %v225
    %v242 = vmul.f32 %v114, %v226
    %v243 = vmul.f32 %v115, %v227
    %v244 = vmul.f32 %v116, %v228
    %v245 = vmul.f32 %v117, %v229
    %v246 = vmul.f32 %v118, %v230
    %v247 = vmul.f32 %v119, %v231
    %v248 = vmul.f32 %v120, %v232
    %v249 = vmul.f32 %v121, %v233
    %v250 = vmul.f32 %v122, %v234
    %v251 = vmul.f32 %v123, %v235
    %v252 = vmul.f32 %v124, %v236
    %v253 = vmul.f32 %v125, %v237
    %v254 = vmul.f32 %v126, %v238
    %v255 = vmul.f32 %v127, %v239
    %v256 = vmul.f32 %v128, %v240
    %v257 = vld [vmem:[%s1] sm:$0x1]
    %v259 = vlaneseq
    %v260 = vshrl.u32 %v259, 7
    %v261 = vsub.s32 0, %v260
    %v262 = vrot.slane %v257, %v261
    %v264 = vmul.f32 %v241, %v262
    %v265 = vmul.f32 %v242, %v262
    %v266 = vmul.f32 %v243, %v262
    %v267 = vmul.f32 %v244, %v262
    %v268 = vmul.f32 %v245, %v262
    %v269 = vmul.f32 %v246, %v262
    %v270 = vmul.f32 %v247, %v262
    %v271 = vmul.f32 %v248, %v262
    %v272 = vmul.f32 %v249, %v262
    %v273 = vmul.f32 %v250, %v262
    %v274 = vmul.f32 %v251, %v262
    %v275 = vmul.f32 %v252, %v262
    %v276 = vmul.f32 %v253, %v262
    %v277 = vmul.f32 %v254, %v262
    %v278 = vmul.f32 %v255, %v262
    %v279 = vmul.f32 %v256, %v262
    %v280 = vld [vmem:[%s2] sm:$0x1]
    %v282 = vlaneseq
    %v283 = vshrl.u32 %v282, 7
    %v284 = vsub.s32 0, %v283
    %v285 = vrot.slane %v280, %v284
    %v287 = vadd.f32 %v264, %v285
    %v288 = vadd.f32 %v265, %v285
    %v289 = vadd.f32 %v266, %v285
    %v290 = vadd.f32 %v267, %v285
    %v291 = vadd.f32 %v268, %v285
    %v292 = vadd.f32 %v269, %v285
    %v293 = vadd.f32 %v270, %v285
    %v294 = vadd.f32 %v271, %v285
    %v295 = vadd.f32 %v272, %v285
    %v296 = vadd.f32 %v273, %v285
    %v297 = vadd.f32 %v274, %v285
    %v298 = vadd.f32 %v275, %v285
    %v299 = vadd.f32 %v276, %v285
    %v300 = vadd.f32 %v277, %v285
    %v301 = vadd.f32 %v278, %v285
    %v302 = vadd.f32 %v279, %v285
    %v303 = vpack.c.bf16 %v288, %v287
    %v304 = vpack.c.bf16 %v290, %v289
    %v305 = vpack.c.bf16 %v292, %v291
    %v306 = vpack.c.bf16 %v294, %v293
    %v307 = vpack.c.bf16 %v296, %v295
    %v308 = vpack.c.bf16 %v298, %v297
    %v309 = vpack.c.bf16 %v300, %v299
    %v310 = vpack.c.bf16 %v302, %v301
    %v319 = vunpack.c.l.b16 %v303
    %v320 = vunpack.c.h.b16 %v303
    %v321 = vunpack.c.l.b16 %v304
    %v322 = vunpack.c.h.b16 %v304
    %v323 = vunpack.c.l.b16 %v305
    %v324 = vunpack.c.h.b16 %v305
    %v325 = vunpack.c.l.b16 %v306
    %v326 = vunpack.c.h.b16 %v306
    %v327 = vunpack.c.l.b16 %v307
    %v328 = vunpack.c.h.b16 %v307
    %v329 = vunpack.c.l.b16 %v308
    %v330 = vunpack.c.h.b16 %v308
    %v331 = vunpack.c.l.b16 %v309
    %v332 = vunpack.c.h.b16 %v309
    %v333 = vunpack.c.l.b16 %v310
    %v334 = vunpack.c.h.b16 %v310
    %v335 = vpack.c.b16 %v319, %v319
    %v336 = vpack.c.b16 %v320, %v320
    %v337 = vpack.c.b16 %v321, %v321
    %v338 = vpack.c.b16 %v322, %v322
    %v339 = vpack.c.b16 %v323, %v323
    %v340 = vpack.c.b16 %v324, %v324
    %v341 = vpack.c.b16 %v325, %v325
    %v342 = vpack.c.b16 %v326, %v326
    %v343 = vpack.c.b16 %v327, %v327
    %v344 = vpack.c.b16 %v328, %v328
    %v345 = vpack.c.b16 %v329, %v329
    %v346 = vpack.c.b16 %v330, %v330
    %v347 = vpack.c.b16 %v331, %v331
    %v348 = vpack.c.b16 %v332, %v332
    %v349 = vpack.c.b16 %v333, %v333
    %v350 = vpack.c.b16 %v334, %v334
    %vm367 = vcmask 257024
    %368 = vst.msk [vmem:[#allocation2] sm:$0xf] %vm367, %v335
    %369 = vst.msk [vmem:[#allocation2 + $0x4] sm:$0xf] %vm367, %v336
    %370 = vst.msk [vmem:[#allocation2 + $0x8] sm:$0xf] %vm367, %v337
    %371 = vst.msk [vmem:[#allocation2 + $0xc] sm:$0xf] %vm367, %v338
    %372 = vst.msk [vmem:[#allocation2 + $0x10] sm:$0xf] %vm367, %v339
    %373 = vst.msk [vmem:[#allocation2 + $0x14] sm:$0xf] %vm367, %v340
    %374 = vst.msk [vmem:[#allocation2 + $0x18] sm:$0xf] %vm367, %v341
    %375 = vst.msk [vmem:[#allocation2 + $0x1c] sm:$0xf] %vm367, %v342
    %376 = vst.msk [vmem:[#allocation2 + $0x20] sm:$0xf] %vm367, %v343
    %377 = vst.msk [vmem:[#allocation2 + $0x24] sm:$0xf] %vm367, %v344
    %378 = vst.msk [vmem:[#allocation2 + $0x28] sm:$0xf] %vm367, %v345
    %379 = vst.msk [vmem:[#allocation2 + $0x2c] sm:$0xf] %vm367, %v346
    %380 = vst.msk [vmem:[#allocation2 + $0x30] sm:$0xf] %vm367, %v347
    %381 = vst.msk [vmem:[#allocation2 + $0x34] sm:$0xf] %vm367, %v348
    %382 = vst.msk [vmem:[#allocation2 + $0x38] sm:$0xf] %vm367, %v349
    %383 = vst.msk [vmem:[#allocation2 + $0x3c] sm:$0xf] %vm367, %v350
    %384 = vst [vmem:[#allocation3] sm:$0xff] 0.0
    %385 = vst [vmem:[#allocation3 + $0x8] sm:$0xff] 0.0
    %386 = vst [vmem:[#allocation3 + $0x10] sm:$0xff] 0.0
    %387 = vst [vmem:[#allocation3 + $0x18] sm:$0xff] 0.0
    %388 = vst [vmem:[#allocation3 + $0x20] sm:$0xff] 0.0
    %389 = vst [vmem:[#allocation3 + $0x28] sm:$0xff] 0.0
    %390 = vst [vmem:[#allocation3 + $0x30] sm:$0xff] 0.0
    %391 = vst [vmem:[#allocation3 + $0x38] sm:$0xff] 0.0
    %392 = vst [vmem:[#allocation3 + $0x40] sm:$0xff] 0.0
    %393 = vst [vmem:[#allocation3 + $0x48] sm:$0xff] 0.0
    %394 = vst [vmem:[#allocation3 + $0x50] sm:$0xff] 0.0
    %395 = vst [vmem:[#allocation3 + $0x58] sm:$0xff] 0.0
    %396 = vst [vmem:[#allocation3 + $0x60] sm:$0xff] 0.0
    %397 = vst [vmem:[#allocation3 + $0x68] sm:$0xff] 0.0
    %398 = vst [vmem:[#allocation3 + $0x70] sm:$0xff] 0.0
    %399 = vst [vmem:[#allocation3 + $0x78] sm:$0xff] 0.0
  $region33: #{mlp_pallas.1} parent=0 // pred_fallthru
    _
  %v400 = vld [vmem:[#allocation2] sm:$0xf]
  %v401 = vld [vmem:[#allocation2 + $0x4] sm:$0xf]
  %v402 = vld [vmem:[#allocation2 + $0x8] sm:$0xf]
  %v403 = vld [vmem:[#allocation2 + $0xc] sm:$0xf]
  %v404 = vld [vmem:[#allocation2 + $0x10] sm:$0xf]
  %v405 = vld [vmem:[#allocation2 + $0x14] sm:$0xf]
  %v406 = vld [vmem:[#allocation2 + $0x18] sm:$0xf]
  %v407 = vld [vmem:[#allocation2 + $0x1c] sm:$0xf]
  %v408 = vld [vmem:[#allocation2 + $0x20] sm:$0xf]
  %v409 = vld [vmem:[#allocation2 + $0x24] sm:$0xf]
  %v410 = vld [vmem:[#allocation2 + $0x28] sm:$0xf]
  %v411 = vld [vmem:[#allocation2 + $0x2c] sm:$0xf]
  %v412 = vld [vmem:[#allocation2 + $0x30] sm:$0xf]
  %v413 = vld [vmem:[#allocation2 + $0x34] sm:$0xf]
  %v414 = vld [vmem:[#allocation2 + $0x38] sm:$0xf]
  %v415 = vld [vmem:[#allocation2 + $0x3c] sm:$0xf]
  %v416 = vld [vmem:[%s3] sm:$0xf]
  %v417 = vld [vmem:[%s3 + $0x4] sm:$0xf]
  %v418 = vld [vmem:[%s3 + $0x8] sm:$0xf]
  %v419 = vld [vmem:[%s3 + $0xc] sm:$0xf]
  %v420 = vld [vmem:[%s4] sm:$0x1]
  %v422 = vlaneseq
  %v423 = vshrl.u32 %v422, 7
  %v424 = vsub.s32 0, %v423
  %v425 = vrot.slane %v420, %v424
  %v443 = vunpack.c.l.b16 %v400
  %v444 = vunpack.c.l.b16 %v401
  %v445 = vunpack.c.l.b16 %v402
  %v446 = vunpack.c.l.b16 %v403
  %v447 = vunpack.c.l.b16 %v404
  %v448 = vunpack.c.l.b16 %v405
  %v449 = vunpack.c.l.b16 %v406
  %v450 = vunpack.c.l.b16 %v407
  %v451 = vunpack.c.l.b16 %v408
  %v452 = vunpack.c.l.b16 %v409
  %v453 = vunpack.c.l.b16 %v410
  %v454 = vunpack.c.l.b16 %v411
  %v455 = vunpack.c.l.b16 %v412
  %v456 = vunpack.c.l.b16 %v413
  %v457 = vunpack.c.l.b16 %v414
  %v458 = vunpack.c.l.b16 %v415
  %v459 = vpack.c.b16 %v444, %v443
  %v460 = vpack.c.b16 %v446, %v445
  %v461 = vpack.c.b16 %v448, %v447
  %v462 = vpack.c.b16 %v450, %v449
  %v463 = vpack.c.b16 %v452, %v451
  %v464 = vpack.c.b16 %v454, %v453
  %v465 = vpack.c.b16 %v456, %v455
  %v466 = vpack.c.b16 %v458, %v457
  %v471 = vunpack.c.l.b16 %v416
  %v472 = vunpack.c.l.b16 %v417
  %v473 = vunpack.c.l.b16 %v418
  %v474 = vunpack.c.l.b16 %v419
  %v475 = vpack.c.b16 %v472, %v471
  %v476 = vpack.c.b16 %v474, %v473
  %vm479 = vcmask 261120
  %v481 = vsel %vm479, %v459, 0
  %v484 = vsel %vm479, %v460, 0
  %v487 = vsel %vm479, %v461, 0
  %v490 = vsel %vm479, %v462, 0
  %v493 = vsel %vm479, %v463, 0
  %v496 = vsel %vm479, %v464, 0
  %v499 = vsel %vm479, %v465, 0
  %v502 = vsel %vm479, %v466, 0
  %504 = vmatprep.subr.bf16.mxu0 0
  %505 = vmatpush1.bf16.msra.mxu0 0
  %506 = vmatprep.subr.bf16.mxu0 0
  %507 = vmatpush1.bf16.msra.mxu0 0
  %508 = vmatprep.subr.bf16.mxu0 0
  %509 = vmatpush1.bf16.msra.mxu0 0
  %510 = vmatprep.subr.bf16.mxu0 0
  %511 = vmatpush1.bf16.msra.mxu0 0
  %512 = vmatprep.subr.bf16.mxu0 0
  %513 = vmatpush1.bf16.msra.mxu0 0
  %514 = vmatprep.subr.bf16.mxu0 0
  %515 = vmatpush1.bf16.msra.mxu0 0
  %516 = vmatprep.subr.bf16.mxu0 0
  %517 = vmatpush1.bf16.msra.mxu0 %v476
  %518 = vmatprep.subr.bf16.mxu0 0
  %519 = vmatpush1.bf16.msra.mxu0 %v475
  %520 = vmatprep.subr.bf16.mxu0 0
  %521 = vmatpush2.bf16.msra.mxu0 0
  %522 = vmatprep.subr.bf16.mxu0 0
  %523 = vmatpush2.bf16.msra.mxu0 0
  %524 = vmatprep.subr.bf16.mxu0 0
  %525 = vmatpush2.bf16.msra.mxu0 0
  %526 = vmatprep.subr.bf16.mxu0 0
  %527 = vmatpush2.bf16.msra.mxu0 0
  %528 = vmatprep.subr.bf16.mxu0 0
  %529 = vmatpush2.bf16.msra.mxu0 0
  %530 = vmatprep.subr.bf16.mxu0 0
  %531 = vmatpush2.bf16.msra.mxu0 0
  %532 = vmatprep.subr.bf16.mxu0 0
  %533 = vmatpush2.bf16.msra.mxu0 0
  %534 = vmatprep.subr.bf16.mxu0 0
  %535 = vmatpush2.bf16.msra.mxu0 0
  %536 = vmatprep.mubr.bf16.mxu0 0
  %537 = vmatmul.mubr.bf16.gmra.mxu0 %v481
  %v538 = vpop.f32.mrf.mxu0
  %v539 = vadd.f32 %v425, %v538
  %v540 = vpop.f32.mrf.mxu0
  %v541 = vpop.f32.mrf.mxu0
  %v542 = vadd.f32 %v425, %v541
  %v543 = vpop.f32.mrf.mxu0
  %544 = vmatprep.mubr.bf16.mxu0 0
  %545 = vmatmul.mubr.bf16.gmra.mxu0 %v484
  %v546 = vpop.f32.mrf.mxu0
  %v547 = vadd.f32 %v425, %v546
  %v548 = vpop.f32.mrf.mxu0
  %v549 = vpop.f32.mrf.mxu0
  %v550 = vadd.f32 %v425, %v549
  %v551 = vpop.f32.mrf.mxu0
  %552 = vmatprep.mubr.bf16.mxu0 0
  %553 = vmatmul.mubr.bf16.gmra.mxu0 %v487
  %v554 = vpop.f32.mrf.mxu0
  %v555 = vadd.f32 %v425, %v554
  %v556 = vpop.f32.mrf.mxu0
  %v557 = vpop.f32.mrf.mxu0
  %v558 = vadd.f32 %v425, %v557
  %v559 = vpop.f32.mrf.mxu0
  %560 = vmatprep.mubr.bf16.mxu0 0
  %561 = vmatmul.mubr.bf16.gmra.mxu0 %v490
  %v562 = vpop.f32.mrf.mxu0
  %v563 = vadd.f32 %v425, %v562
  %v564 = vpop.f32.mrf.mxu0
  %v565 = vpop.f32.mrf.mxu0
  %v566 = vadd.f32 %v425, %v565
  %v567 = vpop.f32.mrf.mxu0
  %568 = vmatprep.mubr.bf16.mxu0 0
  %569 = vmatmul.mubr.bf16.gmra.mxu0 %v493
  %v570 = vpop.f32.mrf.mxu0
  %v571 = vadd.f32 %v425, %v570
  %v572 = vpop.f32.mrf.mxu0
  %v573 = vpop.f32.mrf.mxu0
  %v574 = vadd.f32 %v425, %v573
  %v575 = vpop.f32.mrf.mxu0
  %576 = vmatprep.mubr.bf16.mxu0 0
  %577 = vmatmul.mubr.bf16.gmra.mxu0 %v496
  %v578 = vpop.f32.mrf.mxu0
  %v579 = vadd.f32 %v425, %v578
  %v580 = vpop.f32.mrf.mxu0
  %v581 = vpop.f32.mrf.mxu0
  %v582 = vadd.f32 %v425, %v581
  %v583 = vpop.f32.mrf.mxu0
  %584 = vmatprep.mubr.bf16.mxu0 0
  %585 = vmatmul.mubr.bf16.gmra.mxu0 %v499
  %v586 = vpop.f32.mrf.mxu0
  %v587 = vadd.f32 %v425, %v586
  %v588 = vpop.f32.mrf.mxu0
  %v589 = vpop.f32.mrf.mxu0
  %v590 = vadd.f32 %v425, %v589
  %v591 = vpop.f32.mrf.mxu0
  %592 = vmatprep.mubr.bf16.mxu0 0
  %593 = vmatmul.mubr.bf16.gmra.mxu0 %v502
  %v594 = vpop.f32.mrf.mxu0
  %v595 = vadd.f32 %v425, %v594
  %v596 = vpop.f32.mrf.mxu0
  %v597 = vpop.f32.mrf.mxu0
  %v598 = vadd.f32 %v425, %v597
  %v599 = vpop.f32.mrf.mxu0
  %600 = vdwg.mxu0
  %v601 = vmul.f32 %v539, 0.5
  %v602 = vmul.f32 %v542, 0.5
  %v603 = vmul.f32 %v547, 0.5
  %v604 = vmul.f32 %v550, 0.5
  %v605 = vmul.f32 %v555, 0.5
  %v606 = vmul.f32 %v558, 0.5
  %v607 = vmul.f32 %v563, 0.5
  %v608 = vmul.f32 %v566, 0.5
  %v609 = vmul.f32 %v571, 0.5
  %v610 = vmul.f32 %v574, 0.5
  %v611 = vmul.f32 %v579, 0.5
  %v612 = vmul.f32 %v582, 0.5
  %v613 = vmul.f32 %v587, 0.5
  %v614 = vmul.f32 %v590, 0.5
  %v615 = vmul.f32 %v595, 0.5
  %v616 = vmul.f32 %v598, 0.5
  %v617 = vmul.f32 %v539, 0.70710677
  %v618 = vmul.f32 %v542, 0.70710677
  %v619 = vmul.f32 %v547, 0.70710677
  %v620 = vmul.f32 %v550, 0.70710677
  %v621 = vmul.f32 %v555, 0.70710677
  %v622 = vmul.f32 %v558, 0.70710677
  %v623 = vmul.f32 %v563, 0.70710677
  %v624 = vmul.f32 %v566, 0.70710677
  %v625 = vmul.f32 %v571, 0.70710677
  %v626 = vmul.f32 %v574, 0.70710677
  %v627 = vmul.f32 %v579, 0.70710677
  %v628 = vmul.f32 %v582, 0.70710677
  %v629 = vmul.f32 %v587, 0.70710677
  %v630 = vmul.f32 %v590, 0.70710677
  %v631 = vmul.f32 %v595, 0.70710677
  %v632 = vmul.f32 %v598, 0.70710677
  %v633 = verf.f32.pop %v617
  %v634 = verf.f32.pop %v618
  %v635 = verf.f32.pop %v619
  %v636 = verf.f32.pop %v620
  %v637 = verf.f32.pop %v621
  %v638 = verf.f32.pop %v622
  %v639 = verf.f32.pop %v623
  %v640 = verf.f32.pop %v624
  %v641 = verf.f32.pop %v625
  %v642 = verf.f32.pop %v626
  %v643 = verf.f32.pop %v627
  %v644 = verf.f32.pop %v628
  %v645 = verf.f32.pop %v629
  %v646 = verf.f32.pop %v630
  %v647 = verf.f32.pop %v631
  %v648 = verf.f32.pop %v632
  %v649 = vadd.f32 %v633, 1.0
  %v650 = vadd.f32 %v634, 1.0
  %v651 = vadd.f32 %v635, 1.0
  %v652 = vadd.f32 %v636, 1.0
  %v653 = vadd.f32 %v637, 1.0
  %v654 = vadd.f32 %v638, 1.0
  %v655 = vadd.f32 %v639, 1.0
  %v656 = vadd.f32 %v640, 1.0
  %v657 = vadd.f32 %v641, 1.0
  %v658 = vadd.f32 %v642, 1.0
  %v659 = vadd.f32 %v643, 1.0
  %v660 = vadd.f32 %v644, 1.0
  %v661 = vadd.f32 %v645, 1.0
  %v662 = vadd.f32 %v646, 1.0
  %v663 = vadd.f32 %v647, 1.0
  %v664 = vadd.f32 %v648, 1.0
  %v665 = vmul.f32 %v601, %v649
  %v666 = vmul.f32 %v602, %v650
  %v667 = vmul.f32 %v603, %v651
  %v668 = vmul.f32 %v604, %v652
  %v669 = vmul.f32 %v605, %v653
  %v670 = vmul.f32 %v606, %v654
  %v671 = vmul.f32 %v607, %v655
  %v672 = vmul.f32 %v608, %v656
  %v673 = vmul.f32 %v609, %v657
  %v674 = vmul.f32 %v610, %v658
  %v675 = vmul.f32 %v611, %v659
  %v676 = vmul.f32 %v612, %v660
  %v677 = vmul.f32 %v613, %v661
  %v678 = vmul.f32 %v614, %v662
  %v679 = vmul.f32 %v615, %v663
  %v680 = vmul.f32 %v616, %v664
  %v681 = vld [vmem:[#allocation3] sm:$0xff]
  %v682 = vld [vmem:[#allocation3 + $0x8] sm:$0xff]
  %v683 = vld [vmem:[#allocation3 + $0x10] sm:$0xff]
  %v684 = vld [vmem:[#allocation3 + $0x18] sm:$0xff]
  %v685 = vld [vmem:[#allocation3 + $0x20] sm:$0xff]
  %v686 = vld [vmem:[#allocation3 + $0x28] sm:$0xff]
  %v687 = vld [vmem:[#allocation3 + $0x30] sm:$0xff]
  %v688 = vld [vmem:[#allocation3 + $0x38] sm:$0xff]
  %v689 = vld [vmem:[#allocation3 + $0x40] sm:$0xff]
  %v690 = vld [vmem:[#allocation3 + $0x48] sm:$0xff]
  %v691 = vld [vmem:[#allocation3 + $0x50] sm:$0xff]
  %v692 = vld [vmem:[#allocation3 + $0x58] sm:$0xff]
  %v693 = vld [vmem:[#allocation3 + $0x60] sm:$0xff]
  %v694 = vld [vmem:[#allocation3 + $0x68] sm:$0xff]
  %v695 = vld [vmem:[#allocation3 + $0x70] sm:$0xff]
  %v696 = vld [vmem:[#allocation3 + $0x78] sm:$0xff]
  %v697 = vpack.c.bf16 %v666, %v665
  %v698 = vpack.c.bf16 %v668, %v667
  %v699 = vpack.c.bf16 %v670, %v669
  %v700 = vpack.c.bf16 %v672, %v671
  %v701 = vpack.c.bf16 %v674, %v673
  %v702 = vpack.c.bf16 %v676, %v675
  %v703 = vpack.c.bf16 %v678, %v677
  %v704 = vpack.c.bf16 %v680, %v679
  %v705 = vld [vmem:[%s5] sm:$0xf]
  %v706 = vld [vmem:[%s5 + $0x4] sm:$0xf]
  %v707 = vld [vmem:[%s5 + $0x8] sm:$0xf]
  %v708 = vld [vmem:[%s5 + $0xc] sm:$0xf]
  %v709 = vld [vmem:[%s5 + $0x10] sm:$0xf]
  %v710 = vld [vmem:[%s5 + $0x14] sm:$0xf]
  %v711 = vld [vmem:[%s5 + $0x18] sm:$0xf]
  %v712 = vld [vmem:[%s5 + $0x1c] sm:$0xf]
  %v713 = vld [vmem:[%s5 + $0x20] sm:$0xf]
  %v714 = vld [vmem:[%s5 + $0x24] sm:$0xf]
  %v715 = vld [vmem:[%s5 + $0x28] sm:$0xf]
  %v716 = vld [vmem:[%s5 + $0x2c] sm:$0xf]
  %v717 = vld [vmem:[%s5 + $0x30] sm:$0xf]
  %v718 = vld [vmem:[%s5 + $0x34] sm:$0xf]
  %v719 = vld [vmem:[%s5 + $0x38] sm:$0xf]
  %v720 = vld [vmem:[%s5 + $0x3c] sm:$0xf]
  %v737 = vunpack.c.l.b16 %v705
  %v738 = vunpack.c.l.b16 %v706
  %v739 = vunpack.c.l.b16 %v707
  %v740 = vunpack.c.l.b16 %v708
  %v741 = vunpack.c.l.b16 %v709
  %v742 = vunpack.c.l.b16 %v710
  %v743 = vunpack.c.l.b16 %v711
  %v744 = vunpack.c.l.b16 %v712
  %v745 = vunpack.c.l.b16 %v713
  %v746 = vunpack.c.l.b16 %v714
  %v747 = vunpack.c.l.b16 %v715
  %v748 = vunpack.c.l.b16 %v716
  %v749 = vunpack.c.l.b16 %v717
  %v750 = vunpack.c.l.b16 %v718
  %v751 = vunpack.c.l.b16 %v719
  %v752 = vunpack.c.l.b16 %v720
  %v753 = vpack.c.b16 %v738, %v737
  %v754 = vpack.c.b16 %v740, %v739
  %v755 = vpack.c.b16 %v742, %v741
  %v756 = vpack.c.b16 %v744, %v743
  %v757 = vpack.c.b16 %v746, %v745
  %v758 = vpack.c.b16 %v748, %v747
  %v759 = vpack.c.b16 %v750, %v749
  %v760 = vpack.c.b16 %v752, %v751
  %769 = vmatprep.subr.bf16.mxu0 0
  %770 = vmatpush1.bf16.msra.mxu0 %v760
  %771 = vmatprep.subr.bf16.mxu0 0
  %772 = vmatpush1.bf16.msra.mxu0 %v759
  %773 = vmatprep.subr.bf16.mxu0 0
  %774 = vmatpush1.bf16.msra.mxu0 %v758
  %775 = vmatprep.subr.bf16.mxu0 0
  %776 = vmatpush1.bf16.msra.mxu0 %v757
  %777 = vmatprep.subr.bf16.mxu0 0
  %778 = vmatpush1.bf16.msra.mxu0 %v756
  %779 = vmatprep.subr.bf16.mxu0 0
  %780 = vmatpush1.bf16.msra.mxu0 %v755
  %781 = vmatprep.subr.bf16.mxu0 0
  %782 = vmatpush1.bf16.msra.mxu0 %v754
  %783 = vmatprep.subr.bf16.mxu0 0
  %784 = vmatpush1.bf16.msra.mxu0 %v753
  %785 = vmatprep.subr.bf16.mxu0 0
  %786 = vmatpush2.bf16.msra.mxu0 0
  %787 = vmatprep.subr.bf16.mxu0 0
  %788 = vmatpush2.bf16.msra.mxu0 0
  %789 = vmatprep.subr.bf16.mxu0 0
  %790 = vmatpush2.bf16.msra.mxu0 0
  %791 = vmatprep.subr.bf16.mxu0 0
  %792 = vmatpush2.bf16.msra.mxu0 0
  %793 = vmatprep.subr.bf16.mxu0 0
  %794 = vmatpush2.bf16.msra.mxu0 0
  %795 = vmatprep.subr.bf16.mxu0 0
  %796 = vmatpush2.bf16.msra.mxu0 0
  %797 = vmatprep.subr.bf16.mxu0 0
  %798 = vmatpush2.bf16.msra.mxu0 0
  %799 = vmatprep.subr.bf16.mxu0 0
  %800 = vmatpush2.bf16.msra.mxu0 0
  %801 = vmatprep.mubr.bf16.mxu0 0
  %802 = vmatmul.mubr.bf16.gmra.mxu0 %v697
  %v803 = vpop.f32.mrf.mxu0
  %v804 = vadd.f32 0.0, %v803
  %v805 = vpop.f32.mrf.mxu0
  %v806 = vpop.f32.mrf.mxu0
  %v807 = vadd.f32 0.0, %v806
  %v808 = vpop.f32.mrf.mxu0
  %809 = vmatprep.mubr.bf16.mxu0 0
  %810 = vmatmul.mubr.bf16.gmra.mxu0 %v698
  %v811 = vpop.f32.mrf.mxu0
  %v812 = vadd.f32 0.0, %v811
  %v813 = vpop.f32.mrf.mxu0
  %v814 = vpop.f32.mrf.mxu0
  %v815 = vadd.f32 0.0, %v814
  %v816 = vpop.f32.mrf.mxu0
  %817 = vmatprep.mubr.bf16.mxu0 0
  %818 = vmatmul.mubr.bf16.gmra.mxu0 %v699
  %v819 = vpop.f32.mrf.mxu0
  %v820 = vadd.f32 0.0, %v819
  %v821 = vpop.f32.mrf.mxu0
  %v822 = vpop.f32.mrf.mxu0
  %v823 = vadd.f32 0.0, %v822
  %v824 = vpop.f32.mrf.mxu0
  %825 = vmatprep.mubr.bf16.mxu0 0
  %826 = vmatmul.mubr.bf16.gmra.mxu0 %v700
  %v827 = vpop.f32.mrf.mxu0
  %v828 = vadd.f32 0.0, %v827
  %v829 = vpop.f32.mrf.mxu0
  %v830 = vpop.f32.mrf.mxu0
  %v831 = vadd.f32 0.0, %v830
  %v832 = vpop.f32.mrf.mxu0
  %833 = vmatprep.mubr.bf16.mxu0 0
  %834 = vmatmul.mubr.bf16.gmra.mxu0 %v701
  %v835 = vpop.f32.mrf.mxu0
  %v836 = vadd.f32 0.0, %v835
  %v837 = vpop.f32.mrf.mxu0
  %v838 = vpop.f32.mrf.mxu0
  %v839 = vadd.f32 0.0, %v838
  %v840 = vpop.f32.mrf.mxu0
  %841 = vmatprep.mubr.bf16.mxu0 0
  %842 = vmatmul.mubr.bf16.gmra.mxu0 %v702
  %v843 = vpop.f32.mrf.mxu0
  %v844 = vadd.f32 0.0, %v843
  %v845 = vpop.f32.mrf.mxu0
  %v846 = vpop.f32.mrf.mxu0
  %v847 = vadd.f32 0.0, %v846
  %v848 = vpop.f32.mrf.mxu0
  %849 = vmatprep.mubr.bf16.mxu0 0
  %850 = vmatmul.mubr.bf16.gmra.mxu0 %v703
  %v851 = vpop.f32.mrf.mxu0
  %v852 = vadd.f32 0.0, %v851
  %v853 = vpop.f32.mrf.mxu0
  %v854 = vpop.f32.mrf.mxu0
  %v855 = vadd.f32 0.0, %v854
  %v856 = vpop.f32.mrf.mxu0
  %857 = vmatprep.mubr.bf16.mxu0 0
  %858 = vmatmul.mubr.bf16.gmra.mxu0 %v704
  %v859 = vpop.f32.mrf.mxu0
  %v860 = vadd.f32 0.0, %v859
  %v861 = vpop.f32.mrf.mxu0
  %v862 = vpop.f32.mrf.mxu0
  %v863 = vadd.f32 0.0, %v862
  %v864 = vpop.f32.mrf.mxu0
  %865 = vdwg.mxu0
  %v866 = vadd.f32 %v681, %v804
  %v867 = vadd.f32 %v682, %v807
  %v868 = vadd.f32 %v683, %v812
  %v869 = vadd.f32 %v684, %v815
  %v870 = vadd.f32 %v685, %v820
  %v871 = vadd.f32 %v686, %v823
  %v872 = vadd.f32 %v687, %v828
  %v873 = vadd.f32 %v688, %v831
  %v874 = vadd.f32 %v689, %v836
  %v875 = vadd.f32 %v690, %v839
  %v876 = vadd.f32 %v691, %v844
  %v877 = vadd.f32 %v692, %v847
  %v878 = vadd.f32 %v693, %v852
  %v879 = vadd.f32 %v694, %v855
  %v880 = vadd.f32 %v695, %v860
  %v881 = vadd.f32 %v696, %v863
  %882 = vst [vmem:[#allocation3] sm:$0xff] %v866
  %883 = vst [vmem:[#allocation3 + $0x8] sm:$0xff] %v867
  %884 = vst [vmem:[#allocation3 + $0x10] sm:$0xff] %v868
  %885 = vst [vmem:[#allocation3 + $0x18] sm:$0xff] %v869
  %886 = vst [vmem:[#allocation3 + $0x20] sm:$0xff] %v870
  %887 = vst [vmem:[#allocation3 + $0x28] sm:$0xff] %v871
  %888 = vst [vmem:[#allocation3 + $0x30] sm:$0xff] %v872
  %889 = vst [vmem:[#allocation3 + $0x38] sm:$0xff] %v873
  %890 = vst [vmem:[#allocation3 + $0x40] sm:$0xff] %v874
  %891 = vst [vmem:[#allocation3 + $0x48] sm:$0xff] %v875
  %892 = vst [vmem:[#allocation3 + $0x50] sm:$0xff] %v876
  %893 = vst [vmem:[#allocation3 + $0x58] sm:$0xff] %v877
  %894 = vst [vmem:[#allocation3 + $0x60] sm:$0xff] %v878
  %895 = vst [vmem:[#allocation3 + $0x68] sm:$0xff] %v879
  %896 = vst [vmem:[#allocation3 + $0x70] sm:$0xff] %v880
  %897 = vst [vmem:[#allocation3 + $0x78] sm:$0xff] %v881
  // Predicated region
  $region34: #{mlp_pallas.1} parent=0 // pred_check
    %p898 = pneg %p27
  $region35: #{mlp_pallas.1} parent=0 // pred_check_branch
    %900 = sbr.rel (%p898) target = $region37
  $region36: #{mlp_pallas.1} parent=0 // pred_region
    %v901 = vld [vmem:[#allocation3] sm:$0xff]
    %v902 = vld [vmem:[#allocation3 + $0x8] sm:$0xff]
    %v903 = vld [vmem:[#allocation3 + $0x10] sm:$0xff]
    %v904 = vld [vmem:[#allocation3 + $0x18] sm:$0xff]
    %v905 = vld [vmem:[#allocation3 + $0x20] sm:$0xff]
    %v906 = vld [vmem:[#allocation3 + $0x28] sm:$0xff]
    %v907 = vld [vmem:[#allocation3 + $0x30] sm:$0xff]
    %v908 = vld [vmem:[#allocation3 + $0x38] sm:$0xff]
    %v909 = vld [vmem:[#allocation3 + $0x40] sm:$0xff]
    %v910 = vld [vmem:[#allocation3 + $0x48] sm:$0xff]
    %v911 = vld [vmem:[#allocation3 + $0x50] sm:$0xff]
    %v912 = vld [vmem:[#allocation3 + $0x58] sm:$0xff]
    %v913 = vld [vmem:[#allocation3 + $0x60] sm:$0xff]
    %v914 = vld [vmem:[#allocation3 + $0x68] sm:$0xff]
    %v915 = vld [vmem:[#allocation3 + $0x70] sm:$0xff]
    %v916 = vld [vmem:[#allocation3 + $0x78] sm:$0xff]
    %v917 = vld [vmem:[%s6] sm:$0x1]
    %v919 = vlaneseq
    %v920 = vshrl.u32 %v919, 7
    %v921 = vsub.s32 0, %v920
    %v922 = vrot.slane %v917, %v921
    %v924 = vadd.f32 %v901, %v922
    %v925 = vadd.f32 %v902, %v922
    %v926 = vadd.f32 %v903, %v922
    %v927 = vadd.f32 %v904, %v922
    %v928 = vadd.f32 %v905, %v922
    %v929 = vadd.f32 %v906, %v922
    %v930 = vadd.f32 %v907, %v922
    %v931 = vadd.f32 %v908, %v922
    %v932 = vadd.f32 %v909, %v922
    %v933 = vadd.f32 %v910, %v922
    %v934 = vadd.f32 %v911, %v922
    %v935 = vadd.f32 %v912, %v922
    %v936 = vadd.f32 %v913, %v922
    %v937 = vadd.f32 %v914, %v922
    %v938 = vadd.f32 %v915, %v922
    %v939 = vadd.f32 %v916, %v922
    %940 = vst [vmem:[%s7] sm:$0xff] %v924
    %941 = vst [vmem:[%s7 + $0x8] sm:$0xff] %v925
    %942 = vst [vmem:[%s7 + $0x10] sm:$0xff] %v926
    %943 = vst [vmem:[%s7 + $0x18] sm:$0xff] %v927
    %944 = vst [vmem:[%s7 + $0x20] sm:$0xff] %v928
    %945 = vst [vmem:[%s7 + $0x28] sm:$0xff] %v929
    %946 = vst [vmem:[%s7 + $0x30] sm:$0xff] %v930
    %947 = vst [vmem:[%s7 + $0x38] sm:$0xff] %v931
    %948 = vst [vmem:[%s7 + $0x40] sm:$0xff] %v932
    %949 = vst [vmem:[%s7 + $0x48] sm:$0xff] %v933
    %950 = vst [vmem:[%s7 + $0x50] sm:$0xff] %v934
    %951 = vst [vmem:[%s7 + $0x58] sm:$0xff] %v935
    %952 = vst [vmem:[%s7 + $0x60] sm:$0xff] %v936
    %953 = vst [vmem:[%s7 + $0x68] sm:$0xff] %v937
    %954 = vst [vmem:[%s7 + $0x70] sm:$0xff] %v938
    %955 = vst [vmem:[%s7 + $0x78] sm:$0xff] %v939
  $region37: #{mlp_pallas.1} parent=0 // pred_fallthru
    _
  // Predicated region
  $region38: #{mlp_pallas.1} parent=0 // pred_check
    _
  $region39: #{mlp_pallas.1} parent=0 // pred_check_branch
    %957 = sbr.rel (0) target = $region41
  $region40: #{mlp_pallas.1} parent=0 // pred_region
    _
  $region41: #{mlp_pallas.1} parent=0 // pred_fallthru
    _
  // Predicated region
  $region42: #{mlp_pallas.1} parent=0 // pred_check
    _
  $region43: #{mlp_pallas.1} parent=0 // pred_check_branch
    %959 = sbr.rel (0) target = $region45
  $region44: #{mlp_pallas.1} parent=0 // pred_region
    _
  $region45: #{mlp_pallas.1} parent=0 // pred_fallthru
    _

</llo_original>
